<compile_context>
chip_gen: v7x
topology: tpu7x:2x2x1
jax: 0.10.0
libtpu: 0.0.40
codegen_flags: <defaults>
</compile_context>

<pallas_src>
import jax
import jax.numpy as jnp
from jax.experimental import pallas as pl
from jax.experimental.pallas import tpu as pltpu


_SMALL_PATH_MAX_F32_BYTES = 4 << 20    # single-block path below this f32-equivalent size
_COMPUTE_CHUNK_F32_BYTES = 1 << 20     # ~1 MiB of f32 slab data per in-kernel chunk


def _vmem_capacity_bytes():
    """Physical VMEM per core; conservative 64 MiB fallback (v7x per-TC)."""
    try:
        cap = int(pltpu.get_tpu_info().vmem_capacity_bytes)
        if cap > 0:
            return cap
    except Exception:
        pass
    return 64 << 20


def _tensorcores_per_chip():
    """2 on dual-TensorCore chips (v4 / v5p / v7x), 1 otherwise (v5e / v6e)."""
    try:
        kind = jax.devices()[0].device_kind.lower()
    except Exception:
        return 1
    if ("v4" in kind) or ("v5p" in kind) or ("v7" in kind):
        return 2
    return 1


def _small_tv_kernel_factory(batch, channels, height, width, tv_loss_weight):
    count_h = float(channels * (height - 1) * width)
    count_w = float(channels * height * (width - 1))
    inv_b = 1.0 / float(batch)
    wgt = float(tv_loss_weight)

    def kernel(x_ref, o_ref):
        x = x_ref[...].astype(jnp.float32)              # (B*C, H, W), one block
        dh = x[:, 1:, :] - x[:, : height - 1, :]
        dw = x[:, :, 1:] - x[:, :, : width - 1]
        h_tv = jnp.sum(dh * dh)
        w_tv = jnp.sum(dw * dw)
        loss = wgt * 2.0 * (h_tv / count_h + w_tv / count_w) * inv_b
        o_ref[...] = loss.reshape(1, 1)

    return kernel


def _tiled_tv_kernel_factory(batch, channels, height, width, tv_loss_weight, *,
                             bc, tb, cs, n_chunks, n_inner, needs_mask):
    count_h = float(channels * (height - 1) * width)
    count_w = float(channels * height * (width - 1))
    inv_b = 1.0 / float(batch)
    wgt = float(tv_loss_weight)
    w_m1 = max(width - 1, 1)

    def kernel(x_ref, o_ref, acc_h_ref, acc_w_ref):
        p = pl.program_id(0)
        i = pl.program_id(1)
        # Global slab index of this (unclamped) tile's first slab. For a
        # duplicate tile (clamped index_map) this is >= bc, so every slab in it
        # gets masked to zero below and it contributes nothing.
        base = (p * n_inner + i) * tb

        @pl.when(i == 0)
        def _init():
            acc_h_ref[...] = jnp.zeros_like(acc_h_ref)
            acc_w_ref[...] = jnp.zeros_like(acc_w_ref)

        # Chunk over the slab axis so the live f32 temporaries (~3x chunk) stay
        # small regardless of the DMA block size.
        def chunk_body(c, carry):
            ah, aw = carry
            xs = x_ref[pl.ds(c * cs, cs)].astype(jnp.float32)   # (cs, H, W)
            if needs_mask:
                slab_id = base + c * cs + jax.lax.broadcasted_iota(
                    jnp.int32, (cs, 1, 1), 0)
                # Zero invalid slabs (also sanitizes OOB garbage / NaNs). Diffs
                # never cross the slab axis, so zero slabs contribute exactly 0.
                xs = jnp.where(slab_id < bc, xs, 0.0)
            dh = xs[:, 1:, :] - xs[:, : height - 1, :]          # (cs, H-1, W)
            dw = xs[:, :, 1:] - xs[:, :, : width - 1]           # (cs, H,   W-1)
            # Lane-preserving partial sums (reduce slab + sublane axes only);
            # the single cross-lane reduce happens once in finalize.
            ah = ah + jnp.sum(dh * dh, axis=0).sum(axis=0, keepdims=True)
            aw = aw + jnp.sum(dw * dw, axis=0).sum(axis=0, keepdims=True)
            return ah, aw

        ah0 = jnp.zeros((1, width), jnp.float32)
        aw0 = jnp.zeros((1, w_m1), jnp.float32)
        ah, aw = jax.lax.fori_loop(0, n_chunks, chunk_body, (ah0, aw0))
        acc_h_ref[...] += ah
        acc_w_ref[...] += aw

        @pl.when(i == n_inner - 1)
        def _finalize():
            h_tv = jnp.sum(acc_h_ref[...])
            w_tv = jnp.sum(acc_w_ref[...])
            loss = wgt * 2.0 * (h_tv / count_h + w_tv / count_w) * inv_b
            o_ref[...] = loss.reshape(1, 1, 1)

    return kernel


def tv_loss(x, tv_loss_weight=1, *,
            small_path_max_f32_bytes=None,
            target_block_bytes=None,
            compute_chunk_f32_bytes=None,
            num_splits=None):
    """Total variation loss, matching TVLoss.forward semantics.

    x: (B, C, H, W) array. Returns a float32 scalar.
    """
    b, c, h, w = x.shape
    bc = b * c
    elem = jnp.dtype(x.dtype).itemsize
    n_elem = bc * h * w
    input_bytes = n_elem * elem
    f32_bytes = n_elem * 4
    x_flat = x.reshape(bc, h, w)

    cap = _vmem_capacity_bytes()
    if small_path_max_f32_bytes is None:
        small_path_max_f32_bytes = _SMALL_PATH_MAX_F32_BYTES
    if target_block_bytes is None:
        # ~8 MiB on 64 MiB-VMEM parts (v7x), up to 16 MiB on 128 MiB parts.
        target_block_bytes = max(2 << 20, min(16 << 20, cap // 8))
    if compute_chunk_f32_bytes is None:
        compute_chunk_f32_bytes = _COMPUTE_CHUNK_F32_BYTES

    cost = pl.CostEstimate(flops=6 * n_elem, transcendentals=0,
                           bytes_accessed=input_bytes + 4)

    # ---- small-input path: single block, single grid step -------------------
    if f32_bytes <= small_path_max_f32_bytes or h < 2 or w < 2:
        kernel = _small_tv_kernel_factory(b, c, h, w, tv_loss_weight)
        vmem_limit = int(min(max(cap - (8 << 20), 16 << 20),
                             max(32 << 20, 5 * f32_bytes + (4 << 20))))
        out = pl.pallas_call(
            kernel,
            out_shape=jax.ShapeDtypeStruct((1, 1), jnp.float32),
            grid_spec=pltpu.PrefetchScalarGridSpec(
                num_scalar_prefetch=0,
                grid=(1,),
                in_specs=[pl.BlockSpec((bc, h, w), lambda i: (0, 0, 0))],
                out_specs=pl.BlockSpec((1, 1), lambda i: (0, 0)),
            ),
            compiler_params=pltpu.CompilerParams(
                dimension_semantics=("arbitrary",),
                vmem_limit_bytes=vmem_limit),
            cost_estimate=cost,
        )(x_flat)
        return out[0, 0]

    # ---- tiled path: (per-core split, reduction over slab tiles) ------------
    # TODO(synk): a single slab larger than ~VMEM/4 would need an inner H
    # tiling with a 1-row halo; not implemented (same limitation as before).
    slab_bytes = h * w * elem
    slab_f32 = h * w * 4
    tb_raw = max(1, min(target_block_bytes // slab_bytes, bc))  # slabs / DMA block
    cs = max(1, min(compute_chunk_f32_bytes // slab_f32, tb_raw))  # slabs / chunk
    n_chunks = pl.cdiv(tb_raw, cs)
    tb = cs * n_chunks                                           # block = whole chunks

    n_tiles = pl.cdiv(bc, tb)
    if num_splits is None:
        num_splits = _tensorcores_per_chip()
    n_split = max(1, min(int(num_splits), n_tiles))
    n_inner = pl.cdiv(n_tiles, n_split)
    # Masking needed iff the grid does not cover bc exactly (partial last tile
    # and/or a duplicated clamped tile when n_tiles is not a multiple of n_split).
    needs_mask = (n_split * n_inner * tb) != bc

    block_bytes = tb * slab_bytes
    vmem_limit = int(min(max(cap - (8 << 20), 16 << 20),
                         max(32 << 20, 2 * block_bytes + (8 << 20))))

    kernel = _tiled_tv_kernel_factory(
        b, c, h, w, tv_loss_weight,
        bc=bc, tb=tb, cs=cs, n_chunks=n_chunks, n_inner=n_inner,
        needs_mask=needs_mask)

    out = pl.pallas_call(
        kernel,
        out_shape=jax.ShapeDtypeStruct((n_split, 1, 1), jnp.float32),
        grid_spec=pltpu.PrefetchScalarGridSpec(
            num_scalar_prefetch=0,
            grid=(n_split, n_inner),
            in_specs=[pl.BlockSpec(
                (tb, h, w),
                # Clamp so a trailing "duplicate" tile re-reads the last real
                # block (its contribution is fully masked in-kernel) instead of
                # issuing a fully out-of-bounds DMA.
                lambda p, i: (jnp.minimum(p * n_inner + i, n_tiles - 1), 0, 0))],
            out_specs=pl.BlockSpec((1, 1, 1), lambda p, i: (p, 0, 0)),
            scratch_shapes=[
                pltpu.VMEM((1, w), jnp.float32),               # h_tv lane partials
                pltpu.VMEM((1, max(w - 1, 1)), jnp.float32),   # w_tv lane partials
            ],
        ),
        compiler_params=pltpu.CompilerParams(
            dimension_semantics=("parallel", "arbitrary"),
            vmem_limit_bytes=vmem_limit),
        cost_estimate=cost,
    )(x_flat)
    # Per-split partial losses are linear in h_tv / w_tv, so they just add.
    return jnp.sum(out)


def tv_loss_ref(x, tv_loss_weight=1):
    """Pure-JAX reference (mirrors the PyTorch code)."""
    b, c, h, w = x.shape
    count_h = c * (h - 1) * w
    count_w = c * h * (w - 1)
    xf = x.astype(jnp.float32)
    h_tv = jnp.sum((xf[:, :, 1:, :] - xf[:, :, : h - 1, :]) ** 2)
    w_tv = jnp.sum((xf[:, :, :, 1:] - xf[:, :, :, : w - 1]) ** 2)
    return tv_loss_weight * 2.0 * (h_tv / count_h + w_tv / count_w) / b


if __name__ == "__main__":
    key = jax.random.PRNGKey(0)
    k1, k2, k3, k4 = jax.random.split(key, 4)

    # 1) Small path (whole tensor as one block).
    x1 = jax.random.normal(k1, (2, 4, 16, 16), dtype=jnp.float32)
    out1 = jax.block_until_ready(tv_loss(x1, tv_loss_weight=1))
    ref1 = jax.block_until_ready(tv_loss_ref(x1, tv_loss_weight=1))
    assert jnp.allclose(out1, ref1, rtol=1e-5, atol=1e-5), (out1, ref1)

    # 2) Tiled path, bc=15 not divisible by the block: partial-tile masking,
    #    2-way split forced, 2 chunks per block (tb=4, cs=2).
    x2 = jax.random.normal(k2, (3, 5, 16, 16), dtype=jnp.float32)
    out2 = jax.block_until_ready(
        tv_loss(x2, tv_loss_weight=2,
                small_path_max_f32_bytes=0,
                target_block_bytes=4 * 16 * 16 * 4,
                compute_chunk_f32_bytes=2 * 16 * 16 * 4,
                num_splits=2))
    ref2 = jax.block_until_ready(tv_loss_ref(x2, tv_loss_weight=2))
    assert jnp.allclose(out2, ref2, rtol=1e-4, atol=1e-5), (out2, ref2)

    # 3) Tiled path with an odd tile count (tb=3 -> 5 tiles over a 2-way split):
    #    exercises the clamped index_map + fully-masked duplicate tile.
    x3 = jax.random.normal(k3, (5, 3, 16, 16), dtype=jnp.float32)
    out3 = jax.block_until_ready(
        tv_loss(x3, tv_loss_weight=1,
                small_path_max_f32_bytes=0,
                target_block_bytes=3 * 16 * 16 * 4,
                compute_chunk_f32_bytes=1 * 16 * 16 * 4,
                num_splits=2))
    ref3 = jax.block_until_ready(tv_loss_ref(x3, tv_loss_weight=1))
    assert jnp.allclose(out3, ref3, rtol=1e-4, atol=1e-5), (out3, ref3)

    # 4) Tiled path with auto (device-derived) split / block sizing, bf16 input
    #    (native-dtype DMA, in-kernel f32 cast).
    x4 = jax.random.normal(k4, (2, 4, 32, 64), dtype=jnp.float32).astype(jnp.bfloat16)
    out4 = jax.block_until_ready(tv_loss(x4, tv_loss_weight=1,
                                         small_path_max_f32_bytes=0))
    ref4 = jax.block_until_ready(tv_loss_ref(x4, tv_loss_weight=1))
    assert jnp.allclose(out4, ref4, rtol=1e-3, atol=1e-4), (out4, ref4)

    print("KERNEL_OK")
</pallas_src>

<mosaic_0001>
module attributes {stable_mosaic.version = 11 : i64} {
  func.func @kernel(%arg0: i32, %arg1: memref<8x16x16xf32, #tpu.memory_space<vmem>>, %arg2: memref<1x1xf32, #tpu.memory_space<vmem>>) attributes {dimension_semantics = [#tpu.dimension_semantics<arbitrary>], iteration_bounds = array<i64: 1>, scalar_prefetch = 0 : i64, scratch_operands = 0 : i64, tpu.core_type = #tpu.core_type<tc>, window_params = [{pipeline_mode = #tpu.pipeline_mode<synchronous>, transform_indices = @transform_0, window_bounds = array<i64: 8, 16, 16>}, {pipeline_mode = #tpu.pipeline_mode<synchronous>, transform_indices = @transform_1, window_bounds = array<i64: 1, 1>}]} {
    %c0 = arith.constant 0 : index
    %c0_0 = arith.constant 0 : index
    %c0_1 = arith.constant 0 : index
    %0 = vector.load %arg1[%c0, %c0_0, %c0_1] : memref<8x16x16xf32, #tpu.memory_space<vmem>>, vector<8x16x16xf32>
    %1 = vector.extract_strided_slice %0 {offsets = [0, 1, 0], sizes = [8, 15, 16], strides = [1, 1, 1]} : vector<8x16x16xf32> to vector<8x15x16xf32>
    %2 = vector.extract_strided_slice %0 {offsets = [0, 0, 0], sizes = [8, 15, 16], strides = [1, 1, 1]} : vector<8x16x16xf32> to vector<8x15x16xf32>
    %3 = arith.subf %1, %2 : vector<8x15x16xf32>
    %4 = vector.extract_strided_slice %0 {offsets = [0, 0, 1], sizes = [8, 16, 15], strides = [1, 1, 1]} : vector<8x16x16xf32> to vector<8x16x15xf32>
    %5 = vector.extract_strided_slice %0 {offsets = [0, 0, 0], sizes = [8, 16, 15], strides = [1, 1, 1]} : vector<8x16x16xf32> to vector<8x16x15xf32>
    %6 = arith.subf %4, %5 : vector<8x16x15xf32>
    %7 = arith.mulf %3, %3 : vector<8x15x16xf32>
    %8 = vector.shape_cast %7 : vector<8x15x16xf32> to vector<1x8x15x16xf32>
    %cst = arith.constant dense<0.000000e+00> : vector<1xf32>
    %9 = vector.multi_reduction <add>, %8, %cst [1, 2, 3] : vector<1x8x15x16xf32> to vector<1xf32>
    %10 = vector.shape_cast %9 : vector<1xf32> to vector<1x1x1x1xf32>
    %11 = vector.extract %10[0, 0, 0, 0] : f32 from vector<1x1x1x1xf32>
    %12 = arith.mulf %6, %6 : vector<8x16x15xf32>
    %13 = vector.shape_cast %12 : vector<8x16x15xf32> to vector<1x8x16x15xf32>
    %cst_2 = arith.constant dense<0.000000e+00> : vector<1xf32>
    %14 = vector.multi_reduction <add>, %13, %cst_2 [1, 2, 3] : vector<1x8x16x15xf32> to vector<1xf32>
    %15 = vector.shape_cast %14 : vector<1xf32> to vector<1x1x1x1xf32>
    %16 = vector.extract %15[0, 0, 0, 0] : f32 from vector<1x1x1x1xf32>
    %cst_3 = arith.constant 9.600000e+02 : f32
    %17 = arith.divf %11, %cst_3 : f32
    %cst_4 = arith.constant 9.600000e+02 : f32
    %18 = arith.divf %16, %cst_4 : f32
    %19 = arith.addf %17, %18 : f32
    %cst_5 = arith.constant 2.000000e+00 : f32
    %20 = arith.mulf %cst_5, %19 : f32
    %cst_6 = arith.constant 5.000000e-01 : f32
    %21 = arith.mulf %20, %cst_6 : f32
    %22 = vector.broadcast %21 : f32 to vector<1x1xf32>
    %c0_7 = arith.constant 0 : index
    %c0_8 = arith.constant 0 : index
    %23 = vector.load %arg2[%c0_7, %c0_8] : memref<1x1xf32, #tpu.memory_space<vmem>>, vector<1x1xf32>
    tpu.vector_store %arg2[%c0_7, %c0_8], %22 {strides = array<i32>} : memref<1x1xf32, #tpu.memory_space<vmem>>, vector<1x1xf32>,
    return
  }
  func.func @transform_0(%arg0: i32) -> (i32, i32, i32) {
    %c0_i32 = arith.constant 0 : i32
    %c0_i32_0 = arith.constant 0 : i32
    %c0_i32_1 = arith.constant 0 : i32
    %c0_i32_2 = arith.constant 0 : i32
    return %c0_i32, %c0_i32_0, %c0_i32_1 : i32, i32, i32
  }
  func.func @transform_1(%arg0: i32) -> (i32, i32) {
    %c0_i32 = arith.constant 0 : i32
    %c0_i32_0 = arith.constant 0 : i32
    %c0_i32_1 = arith.constant 0 : i32
    return %c0_i32, %c0_i32_0 : i32, i32
  }
}

</mosaic_0001>

<llo_original>
// kernel: tpu_custom_call.1
$region0: #{tpu_custom_call.1}
  #allocation0 [shape = 'u32[]', space=smem, size = 0x4, offset = 0x4, fixed_abs, tag = 'smem constant byte address 0x4 - core index']
  #allocation1 [shape = 'u32[144,128]{1,0:T(1,128)}', space=vmem, size = 0x12000, scoped, tag = 'internal scratch']
  %s0 = inlined_call_operand.hbm [shape: f32[8,16,16], index: 0, kind: input, shape index: {}]
  %s1 = inlined_call_operand.hbm [shape: f32[1,1], index: 1, kind: output, shape index: {}]
  %s2 = sld [smem:[#allocation0]]
  $region18: #{tpu_custom_call.1} parent=0
    _
  %s4 = ssub.s32 1, %s2
  %s5 = scalar_select 0, %s4, %s2
  $region1: #{tpu_custom_call.1} parent=0
    #allocation2 [shape = 'u8[65536]{0}', space=vmem, size = 0x10000, scoped, tag = 'input window, operand 0, single buffered']
    #allocation3 [shape = 's32[1]{0}', space=sflag, size = 0x4, scoped, tag = 'scoped memory for tpu_custom_call.1']
    #allocation4 [shape = 's32[1]{0}', space=sflag, size = 0x4, scoped, tag = 'scoped memory for tpu_custom_call.1']
    #allocation5 [shape = 'u8[512]{0}', space=vmem, size = 0x400, scoped, tag = 'output window, operand 0, single buffered']
    %6 = vsyncpa [#allocation3], 0
    %7 = vsyncpa [#allocation4], 0
    // Predicated region
    $region2: #{tpu_custom_call.1} parent=1 // pred_check
      _
    $region3: #{tpu_custom_call.1} parent=1 // pred_check_branch
      %9 = sbr.rel (0) target = $region5
    $region4: #{tpu_custom_call.1} parent=1 // pred_region
      %s11 = ssub.s32 2048, 2048
      %12 = vsyncadd [#allocation3], %s11
      %s13 = sshll.u32 [#allocation2], 4
      %s14 = int_to_ptr.vmem [resolvable:$true] %s13
      %19 = dma.hbm_to_vmem [thread:$0]  %s0, 2048, %s14, [#allocation3], 128, 128, 8
    $region5: #{tpu_custom_call.1} parent=1 // pred_fallthru
      _
    // Predicated region
    $region6: #{tpu_custom_call.1} parent=1 // pred_check
      _
    $region7: #{tpu_custom_call.1} parent=1 // pred_check_branch
      %21 = sbr.rel (0) target = $region9
    $region8: #{tpu_custom_call.1} parent=1 // pred_region
      %22 = dma.done [#allocation3], 2048
    $region9: #{tpu_custom_call.1} parent=1 // pred_fallthru
      _
    %v23 = vld [vmem:[#allocation2] sm:$0xff]
    %v24 = vld [vmem:[#allocation2 + $0x8] sm:$0xff]
    %v25 = vld [vmem:[#allocation2 + $0x10] sm:$0xff]
    %v26 = vld [vmem:[#allocation2 + $0x18] sm:$0xff]
    %v27 = vld [vmem:[#allocation2 + $0x20] sm:$0xff]
    %v28 = vld [vmem:[#allocation2 + $0x28] sm:$0xff]
    %v29 = vld [vmem:[#allocation2 + $0x30] sm:$0xff]
    %v30 = vld [vmem:[#allocation2 + $0x38] sm:$0xff]
    %v31 = vld [vmem:[#allocation2 + $0x40] sm:$0xff]
    %v32 = vld [vmem:[#allocation2 + $0x48] sm:$0xff]
    %v33 = vld [vmem:[#allocation2 + $0x50] sm:$0xff]
    %v34 = vld [vmem:[#allocation2 + $0x58] sm:$0xff]
    %v35 = vld [vmem:[#allocation2 + $0x60] sm:$0xff]
    %v36 = vld [vmem:[#allocation2 + $0x68] sm:$0xff]
    %v37 = vld [vmem:[#allocation2 + $0x70] sm:$0xff]
    %v38 = vld [vmem:[#allocation2 + $0x78] sm:$0xff]
    %vm55 = vcmask 1040384
    %v56 = vrot.slane %v23, 7
    %v57 = vrot.slane %v24, 7
    %v58 = vsel %vm55, %v56, %v57
    %v59 = vrot.slane %v25, 7
    %v60 = vrot.slane %v26, 7
    %v61 = vsel %vm55, %v59, %v60
    %v62 = vrot.slane %v27, 7
    %v63 = vrot.slane %v28, 7
    %v64 = vsel %vm55, %v62, %v63
    %v65 = vrot.slane %v29, 7
    %v66 = vrot.slane %v30, 7
    %v67 = vsel %vm55, %v65, %v66
    %v68 = vrot.slane %v31, 7
    %v69 = vrot.slane %v32, 7
    %v70 = vsel %vm55, %v68, %v69
    %v71 = vrot.slane %v33, 7
    %v72 = vrot.slane %v34, 7
    %v73 = vsel %vm55, %v71, %v72
    %v74 = vrot.slane %v35, 7
    %v75 = vrot.slane %v36, 7
    %v76 = vsel %vm55, %v74, %v75
    %v77 = vrot.slane %v37, 7
    %v78 = vrot.slane %v38, 7
    %v79 = vsel %vm55, %v77, %v78
    %v96 = vsub.f32 %v23, %v56
    %v97 = vsub.f32 %v24, %v58
    %v98 = vsub.f32 %v25, %v59
    %v99 = vsub.f32 %v26, %v61
    %v100 = vsub.f32 %v27, %v62
    %v101 = vsub.f32 %v28, %v64
    %v102 = vsub.f32 %v29, %v65
    %v103 = vsub.f32 %v30, %v67
    %v104 = vsub.f32 %v31, %v68
    %v105 = vsub.f32 %v32, %v70
    %v106 = vsub.f32 %v33, %v71
    %v107 = vsub.f32 %v34, %v73
    %v108 = vsub.f32 %v35, %v74
    %v109 = vsub.f32 %v36, %v76
    %v110 = vsub.f32 %v37, %v77
    %v111 = vsub.f32 %v38, %v79
    %112 = vrot.lane.b32.xlu0 %v23, 1
    %v113 = vpop.permute.xlu0 %112
    %114 = vrot.lane.b32.xlu0 %v24, 1
    %v115 = vpop.permute.xlu0 %114
    %116 = vrot.lane.b32.xlu0 %v25, 1
    %v117 = vpop.permute.xlu0 %116
    %118 = vrot.lane.b32.xlu0 %v26, 1
    %v119 = vpop.permute.xlu0 %118
    %120 = vrot.lane.b32.xlu0 %v27, 1
    %v121 = vpop.permute.xlu0 %120
    %122 = vrot.lane.b32.xlu0 %v28, 1
    %v123 = vpop.permute.xlu0 %122
    %124 = vrot.lane.b32.xlu0 %v29, 1
    %v125 = vpop.permute.xlu0 %124
    %126 = vrot.lane.b32.xlu0 %v30, 1
    %v127 = vpop.permute.xlu0 %126
    %128 = vrot.lane.b32.xlu0 %v31, 1
    %v129 = vpop.permute.xlu0 %128
    %130 = vrot.lane.b32.xlu0 %v32, 1
    %v131 = vpop.permute.xlu0 %130
    %132 = vrot.lane.b32.xlu0 %v33, 1
    %v133 = vpop.permute.xlu0 %132
    %134 = vrot.lane.b32.xlu0 %v34, 1
    %v135 = vpop.permute.xlu0 %134
    %136 = vrot.lane.b32.xlu0 %v35, 1
    %v137 = vpop.permute.xlu0 %136
    %138 = vrot.lane.b32.xlu0 %v36, 1
    %v139 = vpop.permute.xlu0 %138
    %140 = vrot.lane.b32.xlu0 %v37, 1
    %v141 = vpop.permute.xlu0 %140
    %142 = vrot.lane.b32.xlu0 %v38, 1
    %v143 = vpop.permute.xlu0 %142
    %v160 = vsub.f32 %v23, %v113
    %v161 = vsub.f32 %v24, %v115
    %v162 = vsub.f32 %v25, %v117
    %v163 = vsub.f32 %v26, %v119
    %v164 = vsub.f32 %v27, %v121
    %v165 = vsub.f32 %v28, %v123
    %v166 = vsub.f32 %v29, %v125
    %v167 = vsub.f32 %v30, %v127
    %v168 = vsub.f32 %v31, %v129
    %v169 = vsub.f32 %v32, %v131
    %v170 = vsub.f32 %v33, %v133
    %v171 = vsub.f32 %v34, %v135
    %v172 = vsub.f32 %v35, %v137
    %v173 = vsub.f32 %v36, %v139
    %v174 = vsub.f32 %v37, %v141
    %v175 = vsub.f32 %v38, %v143
    %v176 = vmul.f32 %v96, %v96
    %v177 = vmul.f32 %v97, %v97
    %v178 = vmul.f32 %v98, %v98
    %v179 = vmul.f32 %v99, %v99
    %v180 = vmul.f32 %v100, %v100
    %v181 = vmul.f32 %v101, %v101
    %v182 = vmul.f32 %v102, %v102
    %v183 = vmul.f32 %v103, %v103
    %v184 = vmul.f32 %v104, %v104
    %v185 = vmul.f32 %v105, %v105
    %v186 = vmul.f32 %v106, %v106
    %v187 = vmul.f32 %v107, %v107
    %v188 = vmul.f32 %v108, %v108
    %v189 = vmul.f32 %v109, %v109
    %v190 = vmul.f32 %v110, %v110
    %v191 = vmul.f32 %v111, %v111
    %vm208 = vcmask 1046528
    %v209 = vrot.slane %v176, 1
    %v210 = vrot.slane %v177, 1
    %v211 = vsel %vm208, %v209, %v210
    %v212 = vrot.slane %v178, 1
    %v213 = vrot.slane %v179, 1
    %v214 = vsel %vm208, %v212, %v213
    %v215 = vrot.slane %v180, 1
    %v216 = vrot.slane %v181, 1
    %v217 = vsel %vm208, %v215, %v216
    %v218 = vrot.slane %v182, 1
    %v219 = vrot.slane %v183, 1
    %v220 = vsel %vm208, %v218, %v219
    %v221 = vrot.slane %v184, 1
    %v222 = vrot.slane %v185, 1
    %v223 = vsel %vm208, %v221, %v222
    %v224 = vrot.slane %v186, 1
    %v225 = vrot.slane %v187, 1
    %v226 = vsel %vm208, %v224, %v225
    %v227 = vrot.slane %v188, 1
    %v228 = vrot.slane %v189, 1
    %v229 = vsel %vm208, %v227, %v228
    %v230 = vrot.slane %v190, 1
    %v231 = vrot.slane %v191, 1
    %v232 = vsel %vm208, %v230, %v231
    %vm249 = vcmask 130048
    %v250 = vsel %vm249, %v211, 0.0
    %vm251 = vcmask 129024
    %v252 = vsel %vm251, %v210, 0.0
    %v253 = vadd.f32 %v250, %v252
    %v254 = vsel %vm249, %v214, 0.0
    %v255 = vadd.f32 %v253, %v254
    %v256 = vsel %vm251, %v213, 0.0
    %v257 = vadd.f32 %v255, %v256
    %v258 = vsel %vm249, %v217, 0.0
    %v259 = vadd.f32 %v257, %v258
    %v260 = vsel %vm251, %v216, 0.0
    %v261 = vadd.f32 %v259, %v260
    %v262 = vsel %vm249, %v220, 0.0
    %v263 = vadd.f32 %v261, %v262
    %v264 = vsel %vm251, %v219, 0.0
    %v265 = vadd.f32 %v263, %v264
    %v266 = vsel %vm249, %v223, 0.0
    %v267 = vadd.f32 %v265, %v266
    %v268 = vsel %vm251, %v222, 0.0
    %v269 = vadd.f32 %v267, %v268
    %v270 = vsel %vm249, %v226, 0.0
    %v271 = vadd.f32 %v269, %v270
    %v272 = vsel %vm251, %v225, 0.0
    %v273 = vadd.f32 %v271, %v272
    %v274 = vsel %vm249, %v229, 0.0
    %v275 = vadd.f32 %v273, %v274
    %v276 = vsel %vm251, %v228, 0.0
    %v277 = vadd.f32 %v275, %v276
    %v278 = vsel %vm249, %v232, 0.0
    %v279 = vadd.f32 %v277, %v278
    %v280 = vsel %vm251, %v231, 0.0
    %v281 = vadd.f32 %v279, %v280
    %282 = vadd.xlane.f32.xlu0 %v281
    %v283 = vpop.xlane.xlu0 %282
    %v284 = vrot.slane %v283, 4
    %v285 = vadd.f32 %v283, %v284
    %v286 = vrot.slane %v285, 2
    %v287 = vadd.f32 %v285, %v286
    %v288 = vrot.slane %v287, 1
    %v289 = vadd.f32 %v287, %v288
    %s290 = vtos %v289
    %v291 = vmul.f32 %v160, %v160
    %v292 = vmul.f32 %v161, %v161
    %v293 = vmul.f32 %v162, %v162
    %v294 = vmul.f32 %v163, %v163
    %v295 = vmul.f32 %v164, %v164
    %v296 = vmul.f32 %v165, %v165
    %v297 = vmul.f32 %v166, %v166
    %v298 = vmul.f32 %v167, %v167
    %v299 = vmul.f32 %v168, %v168
    %v300 = vmul.f32 %v169, %v169
    %v301 = vmul.f32 %v170, %v170
    %v302 = vmul.f32 %v171, %v171
    %v303 = vmul.f32 %v172, %v172
    %v304 = vmul.f32 %v173, %v173
    %v305 = vmul.f32 %v174, %v174
    %v306 = vmul.f32 %v175, %v175
    %323 = vrot.lane.b32.xlu0 %v291, 127
    %v324 = vpop.permute.xlu0 %323
    %325 = vrot.lane.b32.xlu0 %v292, 127
    %v326 = vpop.permute.xlu0 %325
    %327 = vrot.lane.b32.xlu0 %v293, 127
    %v328 = vpop.permute.xlu0 %327
    %329 = vrot.lane.b32.xlu0 %v294, 127
    %v330 = vpop.permute.xlu0 %329
    %331 = vrot.lane.b32.xlu0 %v295, 127
    %v332 = vpop.permute.xlu0 %331
    %333 = vrot.lane.b32.xlu0 %v296, 127
    %v334 = vpop.permute.xlu0 %333
    %335 = vrot.lane.b32.xlu0 %v297, 127
    %v336 = vpop.permute.xlu0 %335
    %337 = vrot.lane.b32.xlu0 %v298, 127
    %v338 = vpop.permute.xlu0 %337
    %339 = vrot.lane.b32.xlu0 %v299, 127
    %v340 = vpop.permute.xlu0 %339
    %341 = vrot.lane.b32.xlu0 %v300, 127
    %v342 = vpop.permute.xlu0 %341
    %343 = vrot.lane.b32.xlu0 %v301, 127
    %v344 = vpop.permute.xlu0 %343
    %345 = vrot.lane.b32.xlu0 %v302, 127
    %v346 = vpop.permute.xlu0 %345
    %347 = vrot.lane.b32.xlu0 %v303, 127
    %v348 = vpop.permute.xlu0 %347
    %349 = vrot.lane.b32.xlu0 %v304, 127
    %v350 = vpop.permute.xlu0 %349
    %351 = vrot.lane.b32.xlu0 %v305, 127
    %v352 = vpop.permute.xlu0 %351
    %353 = vrot.lane.b32.xlu0 %v306, 127
    %v354 = vpop.permute.xlu0 %353
    %vm371 = vcmask 121856
    %v372 = vsel %vm371, %v324, 0.0
    %v373 = vsel %vm371, %v326, 0.0
    %v374 = vadd.f32 %v372, %v373
    %v375 = vsel %vm371, %v328, 0.0
    %v376 = vadd.f32 %v374, %v375
    %v377 = vsel %vm371, %v330, 0.0
    %v378 = vadd.f32 %v376, %v377
    %v379 = vsel %vm371, %v332, 0.0
    %v380 = vadd.f32 %v378, %v379
    %v381 = vsel %vm371, %v334, 0.0
    %v382 = vadd.f32 %v380, %v381
    %v383 = vsel %vm371, %v336, 0.0
    %v384 = vadd.f32 %v382, %v383
    %v385 = vsel %vm371, %v338, 0.0
    %v386 = vadd.f32 %v384, %v385
    %v387 = vsel %vm371, %v340, 0.0
    %v388 = vadd.f32 %v386, %v387
    %v389 = vsel %vm371, %v342, 0.0
    %v390 = vadd.f32 %v388, %v389
    %v391 = vsel %vm371, %v344, 0.0
    %v392 = vadd.f32 %v390, %v391
    %v393 = vsel %vm371, %v346, 0.0
    %v394 = vadd.f32 %v392, %v393
    %v395 = vsel %vm371, %v348, 0.0
    %v396 = vadd.f32 %v394, %v395
    %v397 = vsel %vm371, %v350, 0.0
    %v398 = vadd.f32 %v396, %v397
    %v399 = vsel %vm371, %v352, 0.0
    %v400 = vadd.f32 %v398, %v399
    %v401 = vsel %vm371, %v354, 0.0
    %v402 = vadd.f32 %v400, %v401
    %403 = vadd.xlane.f32.xlu0 %v402
    %v404 = vpop.xlane.xlu0 %403
    %v405 = vrot.slane %v404, 4
    %v406 = vadd.f32 %v404, %v405
    %v407 = vrot.slane %v406, 2
    %v408 = vadd.f32 %v406, %v407
    %v409 = vrot.slane %v408, 1
    %v410 = vadd.f32 %v408, %v409
    %s411 = vtos %v410
    %v412 = vrcp.pop 960.0
    %s413 = vtos %v412
    %s414 = smul.f32 %s290, %s413
    %v415 = vrcp.pop 960.0
    %s416 = vtos %v415
    %s417 = smul.f32 %s411, %s416
    %s418 = sadd.f32 %s414, %s417
    %s419 = smul.f32 %s418, 2.0
    %s420 = smul.f32 %s419, 0.5
    %v421 = vstv %s420
    %vm422 = vcmask 0
    %423 = vst.msk [vmem:[#allocation5] sm:$0x1] %vm422, %v421
    // Predicated region
    $region10: #{tpu_custom_call.1} parent=1 // pred_check
      _
    $region11: #{tpu_custom_call.1} parent=1 // pred_check_branch
      %425 = sbr.rel (0) target = $region13
    $region12: #{tpu_custom_call.1} parent=1 // pred_region
      %s427 = ssub.s32 16, 16
      %428 = vsyncadd [#allocation4], %s427
      %s430 = sshll.u32 [#allocation5], 4
      %s431 = int_to_ptr.vmem [resolvable:$true] %s430
      %433 = dma.vmem_to_hbm [thread:$0]  %s431, 16, %s1, [#allocation4]
    $region13: #{tpu_custom_call.1} parent=1 // pred_fallthru
      _
    // Predicated region
    $region14: #{tpu_custom_call.1} parent=1 // pred_check
      _
    $region15: #{tpu_custom_call.1} parent=1 // pred_check_branch
      %435 = sbr.rel (0) target = $region17
    $region16: #{tpu_custom_call.1} parent=1 // pred_region
      %436 = dma.done [#allocation4], 16
    $region17: #{tpu_custom_call.1} parent=1 // pred_fallthru
      _
    %437 = vsyncpa [#allocation3], 1
    %438 = vsyncpa [#allocation4], 1

</llo_original>
